<compile_context>
chip_gen: v6e
topology: v6e:2x2x1
jax: 0.10.0
libtpu: 0.0.40
codegen_flags: <defaults>
</compile_context>

<pallas_src>
import jax
import jax.numpy as jnp
from jax.experimental import pallas as pl
from jax.experimental.pallas import tpu as pltpu


def _round_up(n, m):
    return ((n + m - 1) // m) * m


def _leaky_relu(x, slope=0.01):
    return jnp.where(x > 0, x, slope * x)


def deep_features_kernel(embs_ref, nums_ref,
                         w0e_ref, w0n_ref, b0_ref,
                         w1_ref, b1_ref,
                         w2_ref, b2_ref,
                         o0_ref, o1_ref, o2_ref):
    """Three chained Linear layers; the three pre-activations are the outputs."""
    e = embs_ref[...]                                   # (TM, d_emb)
    n = nums_ref[...]                                   # (TM, d_num)

    # Layer 0 as a split-K matmul: == concat(e, n) @ W0 + b0 (exact).
    h0 = (jnp.dot(e, w0e_ref[...], preferred_element_type=jnp.float32)
          + jnp.dot(n, w0n_ref[...], preferred_element_type=jnp.float32)
          + b0_ref[...])
    o0_ref[...] = h0
    a0 = _leaky_relu(h0)

    h1 = jnp.dot(a0, w1_ref[...], preferred_element_type=jnp.float32) + b1_ref[...]
    o1_ref[...] = h1
    a1 = _leaky_relu(h1)

    h2 = jnp.dot(a1, w2_ref[...], preferred_element_type=jnp.float32) + b2_ref[...]
    o2_ref[...] = h2


def deep_features_forward(embs, nums, params, *, tm_max=1024):
    """embs: (B, dims) f32; nums: (B, num_dims) f32.

    params: [(W0_(dims+num_dims, dims), b0_(1, dims)),
             (W1_(dims, dims), b1), (W2_(dims, dims), b2)].
    Returns the three pre-activation outputs, each (B, dims) f32.
    """
    (w0, b0), (w1, b1), (w2, b2) = params
    B, d_emb = embs.shape
    _, d_num = nums.shape
    dims = w0.shape[1]
    assert w0.shape[0] == d_emb + d_num

    # Split W0 once (static) so layer 0 can consume embs / nums without a concat.
    w0e = w0[:d_emb, :]                                 # (d_emb, dims)
    w0n = w0[d_emb:, :]                                 # (d_num, dims)

    # Batch tile: large enough to amortize per-step pipeline overhead (~0.35us),
    # padded so the grid divides evenly (partial tiles handled by zero rows).
    tm = min(tm_max, _round_up(B, 8))
    b_pad = _round_up(B, tm)
    if b_pad != B:
        pad = b_pad - B
        embs = jnp.pad(embs, ((0, pad), (0, 0)))
        nums = jnp.pad(nums, ((0, pad), (0, 0)))

    grid = (b_pad // tm,)
    d_in = d_emb + d_num

    cost = pl.CostEstimate(
        flops=2 * b_pad * (d_in * dims + 2 * dims * dims),
        transcendentals=0,
        bytes_accessed=4 * (b_pad * d_in + 3 * b_pad * dims
                            + d_in * dims + 2 * dims * dims + 3 * dims),
    )

    o0, o1, o2 = pl.pallas_call(
        deep_features_kernel,
        out_shape=(jax.ShapeDtypeStruct((b_pad, dims), jnp.float32),
                   jax.ShapeDtypeStruct((b_pad, dims), jnp.float32),
                   jax.ShapeDtypeStruct((b_pad, dims), jnp.float32)),
        grid_spec=pltpu.PrefetchScalarGridSpec(
            num_scalar_prefetch=0,
            grid=grid,
            in_specs=[
                pl.BlockSpec((tm, d_emb), lambda i: (i, 0)),   # embs: batch-tiled
                pl.BlockSpec((tm, d_num), lambda i: (i, 0)),   # nums: batch-tiled
                pl.BlockSpec((d_emb, dims), lambda i: (0, 0)),  # W0 (emb rows): resident
                pl.BlockSpec((d_num, dims), lambda i: (0, 0)),  # W0 (num rows): resident
                pl.BlockSpec((1, dims), lambda i: (0, 0)),      # b0: resident
                pl.BlockSpec((dims, dims), lambda i: (0, 0)),   # W1: resident
                pl.BlockSpec((1, dims), lambda i: (0, 0)),      # b1: resident
                pl.BlockSpec((dims, dims), lambda i: (0, 0)),   # W2: resident
                pl.BlockSpec((1, dims), lambda i: (0, 0)),      # b2: resident
            ],
            out_specs=[
                pl.BlockSpec((tm, dims), lambda i: (i, 0)),
                pl.BlockSpec((tm, dims), lambda i: (i, 0)),
                pl.BlockSpec((tm, dims), lambda i: (i, 0)),
            ],
        ),
        compiler_params=pltpu.CompilerParams(
            dimension_semantics=("parallel",),     # shard batch across TCs (v7x)
            vmem_limit_bytes=32 * 1024 * 1024,     # ~1 MiB footprint; safe everywhere
        ),
        cost_estimate=cost,
    )(embs, nums, w0e, w0n, b0, w1, b1, w2, b2)

    if b_pad != B:
        o0, o1, o2 = o0[:B], o1[:B], o2[:B]
    return o0, o1, o2


def make_params(key, in_dim, dims, depth=3):
    """Deterministic Linear params, PyTorch-style uniform(-1/sqrt(fan_in), +)."""
    params = []
    d_in = in_dim
    for _ in range(depth):
        key, kw, kb = jax.random.split(key, 3)
        bound = 1.0 / jnp.sqrt(jnp.float32(d_in))
        w = jax.random.uniform(kw, (d_in, dims), jnp.float32, -bound, bound)
        b = jax.random.uniform(kb, (1, dims), jnp.float32, -bound, bound)
        params.append((w, b))
        d_in = dims
    return params


def embedding_sum(cats, tables):
    """Glue: sum of per-field embedding lookups -> (B, dims).

    tables: stacked (n_cat, vocab, dims).  Single fused gather + sum instead of
    26 sequential take/add ops.
    """
    n_cat, vocab, dims = tables.shape
    flat = tables.reshape(n_cat * vocab, dims)
    idx = cats + (jnp.arange(n_cat, dtype=cats.dtype) * vocab)[None, :]
    gathered = jnp.take(flat, idx.reshape(-1), axis=0)
    return gathered.reshape(cats.shape[0], n_cat, dims).sum(axis=1)


if __name__ == "__main__":
    # Small synthetic shapes consistent with the module.
    B = 8            # batch
    dims = 32        # embedding / hidden width
    num_dims = 13    # Criteo numeric columns I1..I13
    n_cat = 26       # Criteo categorical columns C1..C26
    vocab = 16
    depth = 3

    key = jax.random.PRNGKey(0)
    key, k_cat, k_num, k_emb, k_par = jax.random.split(key, 5)

    cats = jax.random.randint(k_cat, (B, n_cat), 0, vocab, dtype=jnp.int32)
    nums = jax.random.normal(k_num, (B, num_dims), dtype=jnp.float32)

    tables = jax.random.normal(k_emb, (n_cat, vocab, dims), dtype=jnp.float32) * 0.05

    params = make_params(k_par, dims + num_dims, dims, depth)

    # Glue (plain JAX): fused embedding-sum.
    embs = embedding_sum(cats, tables)                  # (B, dims)

    # Hot path (Pallas kernel): chained Linear + leaky_relu, fused in one call.
    o0, o1, o2 = deep_features_forward(embs, nums, params)
    jax.block_until_ready((o0, o1, o2))

    # Pure-JAX reference check (eval-mode semantics).
    xr = jnp.concatenate([embs, nums], axis=1)          # (B, dims + num_dims)
    refs = []
    for w, b in params:
        xr = xr @ w + b
        refs.append(xr)
        xr = jnp.where(xr > 0, xr, 0.01 * xr)
    for got, ref in zip((o0, o1, o2), refs):
        assert got.shape == ref.shape
        assert jnp.allclose(got, ref, atol=1e-4, rtol=1e-4)

    print("KERNEL_OK")
</pallas_src>

<mosaic_0001>
module attributes {stable_mosaic.version = 11 : i64} {
  func.func @deep_features_kernel(%arg0: i32, %arg1: memref<8x32xf32, #tpu.memory_space<vmem>>, %arg2: memref<8x13xf32, #tpu.memory_space<vmem>>, %arg3: memref<32x32xf32, #tpu.memory_space<vmem>>, %arg4: memref<13x32xf32, #tpu.memory_space<vmem>>, %arg5: memref<1x32xf32, #tpu.memory_space<vmem>>, %arg6: memref<32x32xf32, #tpu.memory_space<vmem>>, %arg7: memref<1x32xf32, #tpu.memory_space<vmem>>, %arg8: memref<32x32xf32, #tpu.memory_space<vmem>>, %arg9: memref<1x32xf32, #tpu.memory_space<vmem>>, %arg10: memref<8x32xf32, #tpu.memory_space<vmem>>, %arg11: memref<8x32xf32, #tpu.memory_space<vmem>>, %arg12: memref<8x32xf32, #tpu.memory_space<vmem>>) attributes {dimension_semantics = [#tpu.dimension_semantics<parallel>], iteration_bounds = array<i64: 1>, scalar_prefetch = 0 : i64, scratch_operands = 0 : i64, tpu.core_type = #tpu.core_type<tc>, window_params = [{transform_indices = @transform_0, window_bounds = array<i64: 8, 32>}, {transform_indices = @transform_1, window_bounds = array<i64: 8, 13>}, {pipeline_mode = #tpu.pipeline_mode<synchronous>, transform_indices = @transform_2, window_bounds = array<i64: 32, 32>}, {pipeline_mode = #tpu.pipeline_mode<synchronous>, transform_indices = @transform_3, window_bounds = array<i64: 13, 32>}, {pipeline_mode = #tpu.pipeline_mode<synchronous>, transform_indices = @transform_4, window_bounds = array<i64: 1, 32>}, {pipeline_mode = #tpu.pipeline_mode<synchronous>, transform_indices = @transform_5, window_bounds = array<i64: 32, 32>}, {pipeline_mode = #tpu.pipeline_mode<synchronous>, transform_indices = @transform_6, window_bounds = array<i64: 1, 32>}, {pipeline_mode = #tpu.pipeline_mode<synchronous>, transform_indices = @transform_7, window_bounds = array<i64: 32, 32>}, {pipeline_mode = #tpu.pipeline_mode<synchronous>, transform_indices = @transform_8, window_bounds = array<i64: 1, 32>}, {transform_indices = @transform_9, window_bounds = array<i64: 8, 32>}, {transform_indices = @transform_10, window_bounds = array<i64: 8, 32>}, {transform_indices = @transform_11, window_bounds = array<i64: 8, 32>}]} {
    %c0 = arith.constant 0 : index
    %c0_0 = arith.constant 0 : index
    %0 = vector.load %arg1[%c0, %c0_0] : memref<8x32xf32, #tpu.memory_space<vmem>>, vector<8x32xf32>
    %c0_1 = arith.constant 0 : index
    %c0_2 = arith.constant 0 : index
    %1 = vector.load %arg2[%c0_1, %c0_2] : memref<8x13xf32, #tpu.memory_space<vmem>>, vector<8x13xf32>
    %c0_3 = arith.constant 0 : index
    %c0_4 = arith.constant 0 : index
    %2 = vector.load %arg3[%c0_3, %c0_4] : memref<32x32xf32, #tpu.memory_space<vmem>>, vector<32x32xf32>
    %cst = arith.constant dense<0.000000e+00> : vector<8x32xf32>
    %3 = tpu.matmul %0, %2, %cst {dimension_numbers = #tpu.dot_dimension_numbers<[1], [0], [0], [1], [0, 0, 1, 1], [], []>} : vector<8x32xf32>, vector<32x32xf32>, vector<8x32xf32> -> vector<8x32xf32>
    %c0_5 = arith.constant 0 : index
    %c0_6 = arith.constant 0 : index
    %4 = vector.load %arg4[%c0_5, %c0_6] : memref<13x32xf32, #tpu.memory_space<vmem>>, vector<13x32xf32>
    %cst_7 = arith.constant dense<0.000000e+00> : vector<8x32xf32>
    %5 = tpu.matmul %1, %4, %cst_7 {dimension_numbers = #tpu.dot_dimension_numbers<[1], [0], [0], [1], [0, 0, 1, 1], [], []>} : vector<8x13xf32>, vector<13x32xf32>, vector<8x32xf32> -> vector<8x32xf32>
    %6 = arith.addf %3, %5 : vector<8x32xf32>
    %c0_8 = arith.constant 0 : index
    %c0_9 = arith.constant 0 : index
    %7 = vector.load %arg5[%c0_8, %c0_9] : memref<1x32xf32, #tpu.memory_space<vmem>>, vector<1x32xf32>
    %8 = vector.broadcast %7 : vector<1x32xf32> to vector<8x32xf32>
    %9 = arith.addf %6, %8 : vector<8x32xf32>
    %c0_10 = arith.constant 0 : index
    %c0_11 = arith.constant 0 : index
    %10 = vector.load %arg10[%c0_10, %c0_11] : memref<8x32xf32, #tpu.memory_space<vmem>>, vector<8x32xf32>
    tpu.vector_store %arg10[%c0_10, %c0_11], %9 {strides = array<i32>} : memref<8x32xf32, #tpu.memory_space<vmem>>, vector<8x32xf32>,
    %cst_12 = arith.constant 0.000000e+00 : f32
    %11 = vector.broadcast %cst_12 : f32 to vector<8x32xf32>
    %12 = arith.cmpf ogt, %9, %11 : vector<8x32xf32>
    %cst_13 = arith.constant 0.00999999977 : f32
    %13 = vector.broadcast %cst_13 : f32 to vector<8x32xf32>
    %14 = arith.mulf %13, %9 : vector<8x32xf32>
    %15 = arith.select %12, %9, %14 : vector<8x32xi1>, vector<8x32xf32>
    %c0_14 = arith.constant 0 : index
    %c0_15 = arith.constant 0 : index
    %16 = vector.load %arg6[%c0_14, %c0_15] : memref<32x32xf32, #tpu.memory_space<vmem>>, vector<32x32xf32>
    %cst_16 = arith.constant dense<0.000000e+00> : vector<8x32xf32>
    %17 = tpu.matmul %15, %16, %cst_16 {dimension_numbers = #tpu.dot_dimension_numbers<[1], [0], [0], [1], [0, 0, 1, 1], [], []>} : vector<8x32xf32>, vector<32x32xf32>, vector<8x32xf32> -> vector<8x32xf32>
    %c0_17 = arith.constant 0 : index
    %c0_18 = arith.constant 0 : index
    %18 = vector.load %arg7[%c0_17, %c0_18] : memref<1x32xf32, #tpu.memory_space<vmem>>, vector<1x32xf32>
    %19 = vector.broadcast %18 : vector<1x32xf32> to vector<8x32xf32>
    %20 = arith.addf %17, %19 : vector<8x32xf32>
    %c0_19 = arith.constant 0 : index
    %c0_20 = arith.constant 0 : index
    %21 = vector.load %arg11[%c0_19, %c0_20] : memref<8x32xf32, #tpu.memory_space<vmem>>, vector<8x32xf32>
    tpu.vector_store %arg11[%c0_19, %c0_20], %20 {strides = array<i32>} : memref<8x32xf32, #tpu.memory_space<vmem>>, vector<8x32xf32>,
    %cst_21 = arith.constant 0.000000e+00 : f32
    %22 = vector.broadcast %cst_21 : f32 to vector<8x32xf32>
    %23 = arith.cmpf ogt, %20, %22 : vector<8x32xf32>
    %cst_22 = arith.constant 0.00999999977 : f32
    %24 = vector.broadcast %cst_22 : f32 to vector<8x32xf32>
    %25 = arith.mulf %24, %20 : vector<8x32xf32>
    %26 = arith.select %23, %20, %25 : vector<8x32xi1>, vector<8x32xf32>
    %c0_23 = arith.constant 0 : index
    %c0_24 = arith.constant 0 : index
    %27 = vector.load %arg8[%c0_23, %c0_24] : memref<32x32xf32, #tpu.memory_space<vmem>>, vector<32x32xf32>
    %cst_25 = arith.constant dense<0.000000e+00> : vector<8x32xf32>
    %28 = tpu.matmul %26, %27, %cst_25 {dimension_numbers = #tpu.dot_dimension_numbers<[1], [0], [0], [1], [0, 0, 1, 1], [], []>} : vector<8x32xf32>, vector<32x32xf32>, vector<8x32xf32> -> vector<8x32xf32>
    %c0_26 = arith.constant 0 : index
    %c0_27 = arith.constant 0 : index
    %29 = vector.load %arg9[%c0_26, %c0_27] : memref<1x32xf32, #tpu.memory_space<vmem>>, vector<1x32xf32>
    %30 = vector.broadcast %29 : vector<1x32xf32> to vector<8x32xf32>
    %31 = arith.addf %28, %30 : vector<8x32xf32>
    %c0_28 = arith.constant 0 : index
    %c0_29 = arith.constant 0 : index
    %32 = vector.load %arg12[%c0_28, %c0_29] : memref<8x32xf32, #tpu.memory_space<vmem>>, vector<8x32xf32>
    tpu.vector_store %arg12[%c0_28, %c0_29], %31 {strides = array<i32>} : memref<8x32xf32, #tpu.memory_space<vmem>>, vector<8x32xf32>,
    return
  }
  func.func @transform_0(%arg0: i32) -> (i32, i32) {
    %c0_i32 = arith.constant 0 : i32
    %c0_i32_0 = arith.constant 0 : i32
    return %arg0, %c0_i32 : i32, i32
  }
  func.func @transform_1(%arg0: i32) -> (i32, i32) {
    %c0_i32 = arith.constant 0 : i32
    %c0_i32_0 = arith.constant 0 : i32
    return %arg0, %c0_i32 : i32, i32
  }
  func.func @transform_2(%arg0: i32) -> (i32, i32) {
    %c0_i32 = arith.constant 0 : i32
    %c0_i32_0 = arith.constant 0 : i32
    %c0_i32_1 = arith.constant 0 : i32
    return %c0_i32, %c0_i32_0 : i32, i32
  }
  func.func @transform_3(%arg0: i32) -> (i32, i32) {
    %c0_i32 = arith.constant 0 : i32
    %c0_i32_0 = arith.constant 0 : i32
    %c0_i32_1 = arith.constant 0 : i32
    return %c0_i32, %c0_i32_0 : i32, i32
  }
  func.func @transform_4(%arg0: i32) -> (i32, i32) {
    %c0_i32 = arith.constant 0 : i32
    %c0_i32_0 = arith.constant 0 : i32
    %c0_i32_1 = arith.constant 0 : i32
    return %c0_i32, %c0_i32_0 : i32, i32
  }
  func.func @transform_5(%arg0: i32) -> (i32, i32) {
    %c0_i32 = arith.constant 0 : i32
    %c0_i32_0 = arith.constant 0 : i32
    %c0_i32_1 = arith.constant 0 : i32
    return %c0_i32, %c0_i32_0 : i32, i32
  }
  func.func @transform_6(%arg0: i32) -> (i32, i32) {
    %c0_i32 = arith.constant 0 : i32
    %c0_i32_0 = arith.constant 0 : i32
    %c0_i32_1 = arith.constant 0 : i32
    return %c0_i32, %c0_i32_0 : i32, i32
  }
  func.func @transform_7(%arg0: i32) -> (i32, i32) {
    %c0_i32 = arith.constant 0 : i32
    %c0_i32_0 = arith.constant 0 : i32
    %c0_i32_1 = arith.constant 0 : i32
    return %c0_i32, %c0_i32_0 : i32, i32
  }
  func.func @transform_8(%arg0: i32) -> (i32, i32) {
    %c0_i32 = arith.constant 0 : i32
    %c0_i32_0 = arith.constant 0 : i32
    %c0_i32_1 = arith.constant 0 : i32
    return %c0_i32, %c0_i32_0 : i32, i32
  }
  func.func @transform_9(%arg0: i32) -> (i32, i32) {
    %c0_i32 = arith.constant 0 : i32
    %c0_i32_0 = arith.constant 0 : i32
    return %arg0, %c0_i32 : i32, i32
  }
  func.func @transform_10(%arg0: i32) -> (i32, i32) {
    %c0_i32 = arith.constant 0 : i32
    %c0_i32_0 = arith.constant 0 : i32
    return %arg0, %c0_i32 : i32, i32
  }
  func.func @transform_11(%arg0: i32) -> (i32, i32) {
    %c0_i32 = arith.constant 0 : i32
    %c0_i32_0 = arith.constant 0 : i32
    return %arg0, %c0_i32 : i32, i32
  }
}

</mosaic_0001>

<llo_original>
// kernel: tpu_custom_call.1
$region0: #{tpu_custom_call.1}
  #allocation0 [shape = 'u32[]', space=smem, size = 0x4, offset = 0x4, fixed_abs, tag = 'smem constant byte address 0x4 - core index']
  #allocation1 [shape = 'u32[144,128]{1,0:T(1,128)}', space=vmem, size = 0x12000, scoped, tag = 'internal scratch']
  %s0 = inlined_call_operand.hbm [shape: f32[8,32], index: 0, kind: input, shape index: {}]
  %s1 = inlined_call_operand.hbm [shape: f32[8,13], index: 1, kind: input, shape index: {}]
  %s2 = inlined_call_operand.hbm [shape: f32[32,32], index: 2, kind: input, shape index: {}]
  %s3 = inlined_call_operand.hbm [shape: f32[13,32], index: 3, kind: input, shape index: {}]
  %s4 = inlined_call_operand.vmem [shape: f32[1,32], index: 4, kind: input, shape index: {}]
  %s5 = inlined_call_operand.hbm [shape: f32[32,32], index: 5, kind: input, shape index: {}]
  %s6 = inlined_call_operand.vmem [shape: f32[1,32], index: 6, kind: input, shape index: {}]
  %s7 = inlined_call_operand.hbm [shape: f32[32,32], index: 7, kind: input, shape index: {}]
  %s8 = inlined_call_operand.vmem [shape: f32[1,32], index: 8, kind: input, shape index: {}]
  %s9 = inlined_call_operand.hbm [shape: f32[8,32], index: 9, kind: output, shape index: {0}]
  %s10 = inlined_call_operand.hbm [shape: f32[8,32], index: 10, kind: output, shape index: {1}]
  %s11 = inlined_call_operand.hbm [shape: f32[8,32], index: 11, kind: output, shape index: {2}]
  %12 = xla_tuple %s9, %s10, %s11
  %s13 = sld [smem:[#allocation0]]
  $region86: #{tpu_custom_call.1} parent=0
    _
  %s15 = ssub.s32 1, %s13
  %s16 = scalar_select 0, %s15, %s13
  $region1: #{tpu_custom_call.1} parent=0
    #allocation2 [shape = 'u8[4096]{0}', space=vmem, size = 0x1000, scoped, tag = 'input window, operand 0, single buffered']
    #allocation3 [shape = 's32[1]{0}', space=sflag, size = 0x4, scoped, tag = 'scoped memory for tpu_custom_call.1']
    #allocation4 [shape = 's32[1]{0}', space=sflag, size = 0x4, scoped, tag = 'scoped memory for tpu_custom_call.1']
    #allocation5 [shape = 'u8[4096]{0}', space=vmem, size = 0x1000, scoped, tag = 'input window, operand 1, single buffered']
    #allocation6 [shape = 's32[1]{0}', space=sflag, size = 0x4, scoped, tag = 'scoped memory for tpu_custom_call.1']
    #allocation7 [shape = 'u8[16384]{0}', space=vmem, size = 0x4000, scoped, tag = 'input window, operand 2, single buffered']
    #allocation8 [shape = 'u8[8192]{0}', space=vmem, size = 0x2000, scoped, tag = 'input window, operand 3, single buffered']
    #allocation9 [shape = 's32[1]{0}', space=sflag, size = 0x4, scoped, tag = 'scoped memory for tpu_custom_call.1']
    #allocation10 [shape = 'u8[16384]{0}', space=vmem, size = 0x4000, scoped, tag = 'input window, operand 5, single buffered']
    #allocation11 [shape = 'u8[16384]{0}', space=vmem, size = 0x4000, scoped, tag = 'input window, operand 7, single buffered']
    #allocation12 [shape = 's32[1]{0}', space=sflag, size = 0x4, scoped, tag = 'scoped memory for tpu_custom_call.1']
    #allocation13 [shape = 'u8[4096]{0}', space=vmem, size = 0x1000, scoped, tag = 'output window, operand 0, single buffered']
    #allocation14 [shape = 'u8[4096]{0}', space=vmem, size = 0x1000, scoped, tag = 'output window, operand 1, single buffered']
    #allocation15 [shape = 's32[1]{0}', space=sflag, size = 0x4, scoped, tag = 'scoped memory for tpu_custom_call.1']
    #allocation16 [shape = 'u8[4096]{0}', space=vmem, size = 0x1000, scoped, tag = 'output window, operand 2, single buffered']
    %17 = vsyncpa [#allocation3], 0
    %18 = vsyncpa [#allocation6], 0
    %19 = vsyncpa [#allocation9], 0
    %20 = vsyncpa [#allocation12], 0
    %21 = vsyncpa [#allocation4], 0
    %22 = vsyncpa [#allocation15], 0
    // Predicated region
    $region2: #{tpu_custom_call.1} parent=1 // pred_check
      _
    $region3: #{tpu_custom_call.1} parent=1 // pred_check_branch
      %24 = sbr.rel (0) target = $region5
    $region4: #{tpu_custom_call.1} parent=1 // pred_region
      %s26 = ssub.s32 128, 128
      %27 = vsyncadd [#allocation3], %s26
      %s29 = sshll.u32 [#allocation2], 4
      %s30 = int_to_ptr.vmem [resolvable:$true] %s29
      %32 = dma.hbm_to_vmem [thread:$0]  %s0, 128, %s30, [#allocation3]
    $region5: #{tpu_custom_call.1} parent=1 // pred_fallthru
      _
    // Predicated region
    $region6: #{tpu_custom_call.1} parent=1 // pred_check
      _
    $region7: #{tpu_custom_call.1} parent=1 // pred_check_branch
      %34 = sbr.rel (0) target = $region9
    $region8: #{tpu_custom_call.1} parent=1 // pred_region
      %s36 = ssub.s32 128, 128
      %37 = vsyncadd [#allocation6], %s36
      %s39 = sshll.u32 [#allocation5], 4
      %s40 = int_to_ptr.vmem [resolvable:$true] %s39
      %42 = dma.hbm_to_vmem [thread:$0]  %s1, 128, %s40, [#allocation6]
    $region9: #{tpu_custom_call.1} parent=1 // pred_fallthru
      _
    // Predicated region
    $region10: #{tpu_custom_call.1} parent=1 // pred_check
      _
    $region11: #{tpu_custom_call.1} parent=1 // pred_check_branch
      %44 = sbr.rel (0) target = $region13
    $region12: #{tpu_custom_call.1} parent=1 // pred_region
      %s46 = ssub.s32 512, 512
      %47 = vsyncadd [#allocation6], %s46
      %s48 = sshll.u32 [#allocation7], 4
      %s49 = int_to_ptr.vmem [resolvable:$true] %s48
      %54 = dma.hbm_to_vmem [thread:$0]  %s2, 512, %s49, [#allocation6], 128, 128, 8
    $region13: #{tpu_custom_call.1} parent=1 // pred_fallthru
      _
    // Predicated region
    $region14: #{tpu_custom_call.1} parent=1 // pred_check
      _
    $region15: #{tpu_custom_call.1} parent=1 // pred_check_branch
      %56 = sbr.rel (0) target = $region17
    $region16: #{tpu_custom_call.1} parent=1 // pred_region
      %s58 = ssub.s32 256, 256
      %59 = vsyncadd [#allocation9], %s58
      %s60 = sshll.u32 [#allocation8], 4
      %s61 = int_to_ptr.vmem [resolvable:$true] %s60
      %66 = dma.hbm_to_vmem [thread:$0]  %s3, 256, %s61, [#allocation9], 128, 128, 8
    $region17: #{tpu_custom_call.1} parent=1 // pred_fallthru
      _
    // Predicated region
    $region18: #{tpu_custom_call.1} parent=1 // pred_check
      _
    $region19: #{tpu_custom_call.1} parent=1 // pred_check_branch
      %68 = sbr.rel (0) target = $region21
    $region20: #{tpu_custom_call.1} parent=1 // pred_region
      _
    $region21: #{tpu_custom_call.1} parent=1 // pred_fallthru
      _
    // Predicated region
    $region22: #{tpu_custom_call.1} parent=1 // pred_check
      _
    $region23: #{tpu_custom_call.1} parent=1 // pred_check_branch
      %70 = sbr.rel (0) target = $region25
    $region24: #{tpu_custom_call.1} parent=1 // pred_region
      %s72 = ssub.s32 512, 512
      %73 = vsyncadd [#allocation9], %s72
      %s74 = sshll.u32 [#allocation10], 4
      %s75 = int_to_ptr.vmem [resolvable:$true] %s74
      %80 = dma.hbm_to_vmem [thread:$0]  %s5, 512, %s75, [#allocation9], 128, 128, 8
    $region25: #{tpu_custom_call.1} parent=1 // pred_fallthru
      _
    // Predicated region
    $region26: #{tpu_custom_call.1} parent=1 // pred_check
      _
    $region27: #{tpu_custom_call.1} parent=1 // pred_check_branch
      %82 = sbr.rel (0) target = $region29
    $region28: #{tpu_custom_call.1} parent=1 // pred_region
      _
    $region29: #{tpu_custom_call.1} parent=1 // pred_fallthru
      _
    // Predicated region
    $region30: #{tpu_custom_call.1} parent=1 // pred_check
      _
    $region31: #{tpu_custom_call.1} parent=1 // pred_check_branch
      %84 = sbr.rel (0) target = $region33
    $region32: #{tpu_custom_call.1} parent=1 // pred_region
      %s86 = ssub.s32 512, 512
      %87 = vsyncadd [#allocation12], %s86
      %s88 = sshll.u32 [#allocation11], 4
      %s89 = int_to_ptr.vmem [resolvable:$true] %s88
      %94 = dma.hbm_to_vmem [thread:$0]  %s7, 512, %s89, [#allocation12], 128, 128, 8
    $region33: #{tpu_custom_call.1} parent=1 // pred_fallthru
      _
    // Predicated region
    $region34: #{tpu_custom_call.1} parent=1 // pred_check
      _
    $region35: #{tpu_custom_call.1} parent=1 // pred_check_branch
      %96 = sbr.rel (0) target = $region37
    $region36: #{tpu_custom_call.1} parent=1 // pred_region
      _
    $region37: #{tpu_custom_call.1} parent=1 // pred_fallthru
      _
    // Predicated region
    $region38: #{tpu_custom_call.1} parent=1 // pred_check
      _
    $region39: #{tpu_custom_call.1} parent=1 // pred_check_branch
      %98 = sbr.rel (0) target = $region41
    $region40: #{tpu_custom_call.1} parent=1 // pred_region
      %99 = dma.done [#allocation3], 128
    $region41: #{tpu_custom_call.1} parent=1 // pred_fallthru
      _
    // Predicated region
    $region42: #{tpu_custom_call.1} parent=1 // pred_check
      _
    $region43: #{tpu_custom_call.1} parent=1 // pred_check_branch
      %101 = sbr.rel (0) target = $region45
    $region44: #{tpu_custom_call.1} parent=1 // pred_region
      %102 = dma.done [#allocation6], 128
    $region45: #{tpu_custom_call.1} parent=1 // pred_fallthru
      _
    // Predicated region
    $region46: #{tpu_custom_call.1} parent=1 // pred_check
      _
    $region47: #{tpu_custom_call.1} parent=1 // pred_check_branch
      %104 = sbr.rel (0) target = $region49
    $region48: #{tpu_custom_call.1} parent=1 // pred_region
      %105 = dma.done [#allocation6], 512
    $region49: #{tpu_custom_call.1} parent=1 // pred_fallthru
      _
    // Predicated region
    $region50: #{tpu_custom_call.1} parent=1 // pred_check
      _
    $region51: #{tpu_custom_call.1} parent=1 // pred_check_branch
      %107 = sbr.rel (0) target = $region53
    $region52: #{tpu_custom_call.1} parent=1 // pred_region
      %108 = dma.done [#allocation9], 256
    $region53: #{tpu_custom_call.1} parent=1 // pred_fallthru
      _
    // Predicated region
    $region54: #{tpu_custom_call.1} parent=1 // pred_check
      _
    $region55: #{tpu_custom_call.1} parent=1 // pred_check_branch
      %110 = sbr.rel (0) target = $region57
    $region56: #{tpu_custom_call.1} parent=1 // pred_region
      %111 = dma.done [#allocation9], 512
    $region57: #{tpu_custom_call.1} parent=1 // pred_fallthru
      _
    // Predicated region
    $region58: #{tpu_custom_call.1} parent=1 // pred_check
      _
    $region59: #{tpu_custom_call.1} parent=1 // pred_check_branch
      %113 = sbr.rel (0) target = $region61
    $region60: #{tpu_custom_call.1} parent=1 // pred_region
      %114 = dma.done [#allocation12], 512
    $region61: #{tpu_custom_call.1} parent=1 // pred_fallthru
      _
    %v115 = vld [vmem:[#allocation2] sm:$0xff]
    %v116 = vld [vmem:[#allocation5] sm:$0xff]
    %v117 = vld [vmem:[#allocation7] sm:$0xff]
    %v118 = vld [vmem:[#allocation7 + $0x8] sm:$0xff]
    %v119 = vld [vmem:[#allocation7 + $0x10] sm:$0xff]
    %v120 = vld [vmem:[#allocation7 + $0x18] sm:$0xff]
    %v121 = vld [vmem:[#allocation8] sm:$0xff]
    %v122 = vld [vmem:[#allocation8 + $0x8] sm:$0x1f]
    %vm123 = vcmask 105472
    %v125 = vsel %vm123, %v116, 0
    %vm127 = vcmask 1044480
    %v129 = vsel %vm127, %v122, 0
    %131 = vmatprep.subr.mxu0 0.0
    %132 = vmatpush1.msra.mxu0 0.0
    %133 = vmatprep.subr.mxu0 0.0
    %134 = vmatpush1.msra.mxu0 0.0
    %135 = vmatprep.subr.mxu0 0.0
    %136 = vmatpush1.msra.mxu0 0.0
    %137 = vmatprep.subr.mxu0 0.0
    %138 = vmatpush1.msra.mxu0 0.0
    %139 = vmatprep.subr.mxu0 0.0
    %140 = vmatpush1.msra.mxu0 0.0
    %141 = vmatprep.subr.mxu0 0.0
    %142 = vmatpush1.msra.mxu0 0.0
    %143 = vmatprep.subr.mxu0 0.0
    %144 = vmatpush1.msra.mxu0 0.0
    %145 = vmatprep.subr.mxu0 0.0
    %146 = vmatpush1.msra.mxu0 0.0
    %147 = vmatprep.subr.mxu0 0.0
    %148 = vmatpush1.msra.mxu0 0.0
    %149 = vmatprep.subr.mxu0 0.0
    %150 = vmatpush1.msra.mxu0 0.0
    %151 = vmatprep.subr.mxu0 0.0
    %152 = vmatpush1.msra.mxu0 0.0
    %153 = vmatprep.subr.mxu0 0.0
    %154 = vmatpush1.msra.mxu0 0.0
    %155 = vmatprep.subr.mxu0 0.0
    %156 = vmatpush1.msra.mxu0 0.0
    %157 = vmatprep.subr.mxu0 0.0
    %158 = vmatpush1.msra.mxu0 0.0
    %159 = vmatprep.subr.mxu0 0.0
    %160 = vmatpush1.msra.mxu0 %v129
    %161 = vmatprep.subr.mxu0 0.0
    %162 = vmatpush1.msra.mxu0 %v121
    %163 = vmatprep.subr.mxu0 0.0
    %164 = vmatpush2.msra.mxu0 0.0
    %165 = vmatprep.subr.mxu0 0.0
    %166 = vmatpush2.msra.mxu0 0.0
    %167 = vmatprep.subr.mxu0 0.0
    %168 = vmatpush2.msra.mxu0 0.0
    %169 = vmatprep.subr.mxu0 0.0
    %170 = vmatpush2.msra.mxu0 0.0
    %171 = vmatprep.subr.mxu0 0.0
    %172 = vmatpush2.msra.mxu0 0.0
    %173 = vmatprep.subr.mxu0 0.0
    %174 = vmatpush2.msra.mxu0 0.0
    %175 = vmatprep.subr.mxu0 0.0
    %176 = vmatpush2.msra.mxu0 0.0
    %177 = vmatprep.subr.mxu0 0.0
    %178 = vmatpush2.msra.mxu0 0.0
    %179 = vmatprep.subr.mxu0 0.0
    %180 = vmatpush2.msra.mxu0 0.0
    %181 = vmatprep.subr.mxu0 0.0
    %182 = vmatpush2.msra.mxu0 0.0
    %183 = vmatprep.subr.mxu0 0.0
    %184 = vmatpush2.msra.mxu0 0.0
    %185 = vmatprep.subr.mxu0 0.0
    %186 = vmatpush2.msra.mxu0 0.0
    %187 = vmatprep.subr.mxu0 0.0
    %188 = vmatpush2.msra.mxu0 0.0
    %189 = vmatprep.subr.mxu0 0.0
    %190 = vmatpush2.msra.mxu0 0.0
    %191 = vmatprep.subr.mxu0 0.0
    %192 = vmatpush2.msra.mxu0 0.0
    %193 = vmatprep.subr.mxu0 0.0
    %194 = vmatpush2.msra.mxu0 0.0
    %195 = vmatprep.mubr.f32.mxu0 0.0
    %196 = vmatmul.mubr.f32.gmra.mxu0 %v125
    %v197 = vpop.f32.mrf.mxu0
    %v198 = vadd.f32 0.0, %v197
    %v199 = vpop.f32.mrf.mxu0
    %200 = vdwg.mxu0
    %vm201 = vcmask 261120
    %v203 = vsel %vm201, %v115, 0
    %205 = vmatprep.subr.mxu0 0.0
    %206 = vmatpush1.msra.mxu0 0.0
    %207 = vmatprep.subr.mxu0 0.0
    %208 = vmatpush1.msra.mxu0 0.0
    %209 = vmatprep.subr.mxu0 0.0
    %210 = vmatpush1.msra.mxu0 0.0
    %211 = vmatprep.subr.mxu0 0.0
    %212 = vmatpush1.msra.mxu0 0.0
    %213 = vmatprep.subr.mxu0 0.0
    %214 = vmatpush1.msra.mxu0 0.0
    %215 = vmatprep.subr.mxu0 0.0
    %216 = vmatpush1.msra.mxu0 0.0
    %217 = vmatprep.subr.mxu0 0.0
    %218 = vmatpush1.msra.mxu0 0.0
    %219 = vmatprep.subr.mxu0 0.0
    %220 = vmatpush1.msra.mxu0 0.0
    %221 = vmatprep.subr.mxu0 0.0
    %222 = vmatpush1.msra.mxu0 0.0
    %223 = vmatprep.subr.mxu0 0.0
    %224 = vmatpush1.msra.mxu0 0.0
    %225 = vmatprep.subr.mxu0 0.0
    %226 = vmatpush1.msra.mxu0 0.0
    %227 = vmatprep.subr.mxu0 0.0
    %228 = vmatpush1.msra.mxu0 0.0
    %229 = vmatprep.subr.mxu0 0.0
    %230 = vmatpush1.msra.mxu0 %v120
    %231 = vmatprep.subr.mxu0 0.0
    %232 = vmatpush1.msra.mxu0 %v119
    %233 = vmatprep.subr.mxu0 0.0
    %234 = vmatpush1.msra.mxu0 %v118
    %235 = vmatprep.subr.mxu0 0.0
    %236 = vmatpush1.msra.mxu0 %v117
    %237 = vmatprep.subr.mxu0 0.0
    %238 = vmatpush2.msra.mxu0 0.0
    %239 = vmatprep.subr.mxu0 0.0
    %240 = vmatpush2.msra.mxu0 0.0
    %241 = vmatprep.subr.mxu0 0.0
    %242 = vmatpush2.msra.mxu0 0.0
    %243 = vmatprep.subr.mxu0 0.0
    %244 = vmatpush2.msra.mxu0 0.0
    %245 = vmatprep.subr.mxu0 0.0
    %246 = vmatpush2.msra.mxu0 0.0
    %247 = vmatprep.subr.mxu0 0.0
    %248 = vmatpush2.msra.mxu0 0.0
    %249 = vmatprep.subr.mxu0 0.0
    %250 = vmatpush2.msra.mxu0 0.0
    %251 = vmatprep.subr.mxu0 0.0
    %252 = vmatpush2.msra.mxu0 0.0
    %253 = vmatprep.subr.mxu0 0.0
    %254 = vmatpush2.msra.mxu0 0.0
    %255 = vmatprep.subr.mxu0 0.0
    %256 = vmatpush2.msra.mxu0 0.0
    %257 = vmatprep.subr.mxu0 0.0
    %258 = vmatpush2.msra.mxu0 0.0
    %259 = vmatprep.subr.mxu0 0.0
    %260 = vmatpush2.msra.mxu0 0.0
    %261 = vmatprep.subr.mxu0 0.0
    %262 = vmatpush2.msra.mxu0 0.0
    %263 = vmatprep.subr.mxu0 0.0
    %264 = vmatpush2.msra.mxu0 0.0
    %265 = vmatprep.subr.mxu0 0.0
    %266 = vmatpush2.msra.mxu0 0.0
    %267 = vmatprep.subr.mxu0 0.0
    %268 = vmatpush2.msra.mxu0 0.0
    %269 = vmatprep.mubr.f32.mxu0 0.0
    %270 = vmatmul.mubr.f32.gmra.mxu0 %v203
    %v271 = vpop.f32.mrf.mxu0
    %v272 = vadd.f32 %v198, %v271
    %v273 = vpop.f32.mrf.mxu0
    %274 = vdwg.mxu0
    %v275 = vld [vmem:[%s4] sm:$0x1]
    %v277 = vlaneseq
    %v278 = vshrl.u32 %v277, 7
    %v279 = vsub.s32 0, %v278
    %v280 = vrot.slane %v275, %v279
    %v282 = vadd.f32 %v272, %v280
    %283 = vst.msk [vmem:[#allocation13] sm:$0xff] %vm201, %v282
    %vm284 = vcmp.gt.f32.partialorder %v282, 0.0
    %v285 = vmul.f32 %v282, 0.01
    %v286 = vsel %vm284, %v282, %v285
    %v287 = vld [vmem:[#allocation10] sm:$0xff]
    %v288 = vld [vmem:[#allocation10 + $0x8] sm:$0xff]
    %v289 = vld [vmem:[#allocation10 + $0x10] sm:$0xff]
    %v290 = vld [vmem:[#allocation10 + $0x18] sm:$0xff]
    %v291 = vld [vmem:[%s6] sm:$0x1]
    %v293 = vlaneseq
    %v294 = vshrl.u32 %v293, 7
    %v295 = vsub.s32 0, %v294
    %v296 = vrot.slane %v291, %v295
    %v299 = vsel %vm201, %v286, 0
    %301 = vmatprep.subr.mxu0 0.0
    %302 = vmatpush1.msra.mxu0 0.0
    %303 = vmatprep.subr.mxu0 0.0
    %304 = vmatpush1.msra.mxu0 0.0
    %305 = vmatprep.subr.mxu0 0.0
    %306 = vmatpush1.msra.mxu0 0.0
    %307 = vmatprep.subr.mxu0 0.0
    %308 = vmatpush1.msra.mxu0 0.0
    %309 = vmatprep.subr.mxu0 0.0
    %310 = vmatpush1.msra.mxu0 0.0
    %311 = vmatprep.subr.mxu0 0.0
    %312 = vmatpush1.msra.mxu0 0.0
    %313 = vmatprep.subr.mxu0 0.0
    %314 = vmatpush1.msra.mxu0 0.0
    %315 = vmatprep.subr.mxu0 0.0
    %316 = vmatpush1.msra.mxu0 0.0
    %317 = vmatprep.subr.mxu0 0.0
    %318 = vmatpush1.msra.mxu0 0.0
    %319 = vmatprep.subr.mxu0 0.0
    %320 = vmatpush1.msra.mxu0 0.0
    %321 = vmatprep.subr.mxu0 0.0
    %322 = vmatpush1.msra.mxu0 0.0
    %323 = vmatprep.subr.mxu0 0.0
    %324 = vmatpush1.msra.mxu0 0.0
    %325 = vmatprep.subr.mxu0 0.0
    %326 = vmatpush1.msra.mxu0 %v290
    %327 = vmatprep.subr.mxu0 0.0
    %328 = vmatpush1.msra.mxu0 %v289
    %329 = vmatprep.subr.mxu0 0.0
    %330 = vmatpush1.msra.mxu0 %v288
    %331 = vmatprep.subr.mxu0 0.0
    %332 = vmatpush1.msra.mxu0 %v287
    %333 = vmatprep.subr.mxu0 0.0
    %334 = vmatpush2.msra.mxu0 0.0
    %335 = vmatprep.subr.mxu0 0.0
    %336 = vmatpush2.msra.mxu0 0.0
    %337 = vmatprep.subr.mxu0 0.0
    %338 = vmatpush2.msra.mxu0 0.0
    %339 = vmatprep.subr.mxu0 0.0
    %340 = vmatpush2.msra.mxu0 0.0
    %341 = vmatprep.subr.mxu0 0.0
    %342 = vmatpush2.msra.mxu0 0.0
    %343 = vmatprep.subr.mxu0 0.0
    %344 = vmatpush2.msra.mxu0 0.0
    %345 = vmatprep.subr.mxu0 0.0
    %346 = vmatpush2.msra.mxu0 0.0
    %347 = vmatprep.subr.mxu0 0.0
    %348 = vmatpush2.msra.mxu0 0.0
    %349 = vmatprep.subr.mxu0 0.0
    %350 = vmatpush2.msra.mxu0 0.0
    %351 = vmatprep.subr.mxu0 0.0
    %352 = vmatpush2.msra.mxu0 0.0
    %353 = vmatprep.subr.mxu0 0.0
    %354 = vmatpush2.msra.mxu0 0.0
    %355 = vmatprep.subr.mxu0 0.0
    %356 = vmatpush2.msra.mxu0 0.0
    %357 = vmatprep.subr.mxu0 0.0
    %358 = vmatpush2.msra.mxu0 0.0
    %359 = vmatprep.subr.mxu0 0.0
    %360 = vmatpush2.msra.mxu0 0.0
    %361 = vmatprep.subr.mxu0 0.0
    %362 = vmatpush2.msra.mxu0 0.0
    %363 = vmatprep.subr.mxu0 0.0
    %364 = vmatpush2.msra.mxu0 0.0
    %365 = vmatprep.mubr.f32.mxu0 0.0
    %366 = vmatmul.mubr.f32.gmra.mxu0 %v299
    %v367 = vpop.f32.mrf.mxu0
    %v368 = vadd.f32 %v296, %v367
    %v369 = vpop.f32.mrf.mxu0
    %370 = vdwg.mxu0
    %371 = vst.msk [vmem:[#allocation14] sm:$0xff] %vm201, %v368
    %vm372 = vcmp.gt.f32.partialorder %v368, 0.0
    %v373 = vmul.f32 %v368, 0.01
    %v374 = vsel %vm372, %v368, %v373
    %v375 = vld [vmem:[#allocation11] sm:$0xff]
    %v376 = vld [vmem:[#allocation11 + $0x8] sm:$0xff]
    %v377 = vld [vmem:[#allocation11 + $0x10] sm:$0xff]
    %v378 = vld [vmem:[#allocation11 + $0x18] sm:$0xff]
    %v379 = vld [vmem:[%s8] sm:$0x1]
    %v381 = vlaneseq
    %v382 = vshrl.u32 %v381, 7
    %v383 = vsub.s32 0, %v382
    %v384 = vrot.slane %v379, %v383
    %v387 = vsel %vm201, %v374, 0
    %389 = vmatprep.subr.mxu0 0.0
    %390 = vmatpush1.msra.mxu0 0.0
    %391 = vmatprep.subr.mxu0 0.0
    %392 = vmatpush1.msra.mxu0 0.0
    %393 = vmatprep.subr.mxu0 0.0
    %394 = vmatpush1.msra.mxu0 0.0
    %395 = vmatprep.subr.mxu0 0.0
    %396 = vmatpush1.msra.mxu0 0.0
    %397 = vmatprep.subr.mxu0 0.0
    %398 = vmatpush1.msra.mxu0 0.0
    %399 = vmatprep.subr.mxu0 0.0
    %400 = vmatpush1.msra.mxu0 0.0
    %401 = vmatprep.subr.mxu0 0.0
    %402 = vmatpush1.msra.mxu0 0.0
    %403 = vmatprep.subr.mxu0 0.0
    %404 = vmatpush1.msra.mxu0 0.0
    %405 = vmatprep.subr.mxu0 0.0
    %406 = vmatpush1.msra.mxu0 0.0
    %407 = vmatprep.subr.mxu0 0.0
    %408 = vmatpush1.msra.mxu0 0.0
    %409 = vmatprep.subr.mxu0 0.0
    %410 = vmatpush1.msra.mxu0 0.0
    %411 = vmatprep.subr.mxu0 0.0
    %412 = vmatpush1.msra.mxu0 0.0
    %413 = vmatprep.subr.mxu0 0.0
    %414 = vmatpush1.msra.mxu0 %v378
    %415 = vmatprep.subr.mxu0 0.0
    %416 = vmatpush1.msra.mxu0 %v377
    %417 = vmatprep.subr.mxu0 0.0
    %418 = vmatpush1.msra.mxu0 %v376
    %419 = vmatprep.subr.mxu0 0.0
    %420 = vmatpush1.msra.mxu0 %v375
    %421 = vmatprep.subr.mxu0 0.0
    %422 = vmatpush2.msra.mxu0 0.0
    %423 = vmatprep.subr.mxu0 0.0
    %424 = vmatpush2.msra.mxu0 0.0
    %425 = vmatprep.subr.mxu0 0.0
    %426 = vmatpush2.msra.mxu0 0.0
    %427 = vmatprep.subr.mxu0 0.0
    %428 = vmatpush2.msra.mxu0 0.0
    %429 = vmatprep.subr.mxu0 0.0
    %430 = vmatpush2.msra.mxu0 0.0
    %431 = vmatprep.subr.mxu0 0.0
    %432 = vmatpush2.msra.mxu0 0.0
    %433 = vmatprep.subr.mxu0 0.0
    %434 = vmatpush2.msra.mxu0 0.0
    %435 = vmatprep.subr.mxu0 0.0
    %436 = vmatpush2.msra.mxu0 0.0
    %437 = vmatprep.subr.mxu0 0.0
    %438 = vmatpush2.msra.mxu0 0.0
    %439 = vmatprep.subr.mxu0 0.0
    %440 = vmatpush2.msra.mxu0 0.0
    %441 = vmatprep.subr.mxu0 0.0
    %442 = vmatpush2.msra.mxu0 0.0
    %443 = vmatprep.subr.mxu0 0.0
    %444 = vmatpush2.msra.mxu0 0.0
    %445 = vmatprep.subr.mxu0 0.0
    %446 = vmatpush2.msra.mxu0 0.0
    %447 = vmatprep.subr.mxu0 0.0
    %448 = vmatpush2.msra.mxu0 0.0
    %449 = vmatprep.subr.mxu0 0.0
    %450 = vmatpush2.msra.mxu0 0.0
    %451 = vmatprep.subr.mxu0 0.0
    %452 = vmatpush2.msra.mxu0 0.0
    %453 = vmatprep.mubr.f32.mxu0 0.0
    %454 = vmatmul.mubr.f32.gmra.mxu0 %v387
    %v455 = vpop.f32.mrf.mxu0
    %v456 = vadd.f32 %v384, %v455
    %v457 = vpop.f32.mrf.mxu0
    %458 = vdwg.mxu0
    %459 = vst.msk [vmem:[#allocation16] sm:$0xff] %vm201, %v456
    // Predicated region
    $region62: #{tpu_custom_call.1} parent=1 // pred_check
      _
    $region63: #{tpu_custom_call.1} parent=1 // pred_check_branch
      %461 = sbr.rel (0) target = $region65
    $region64: #{tpu_custom_call.1} parent=1 // pred_region
      %s463 = ssub.s32 128, 128
      %464 = vsyncadd [#allocation4], %s463
      %s466 = sshll.u32 [#allocation13], 4
      %s467 = int_to_ptr.vmem [resolvable:$true] %s466
      %469 = dma.vmem_to_hbm [thread:$0]  %s467, 128, %s9, [#allocation4]
    $region65: #{tpu_custom_call.1} parent=1 // pred_fallthru
      _
    // Predicated region
    $region66: #{tpu_custom_call.1} parent=1 // pred_check
      _
    $region67: #{tpu_custom_call.1} parent=1 // pred_check_branch
      %471 = sbr.rel (0) target = $region69
    $region68: #{tpu_custom_call.1} parent=1 // pred_region
      %s473 = ssub.s32 128, 128
      %474 = vsyncadd [#allocation15], %s473
      %s476 = sshll.u32 [#allocation14], 4
      %s477 = int_to_ptr.vmem [resolvable:$true] %s476
      %479 = dma.vmem_to_hbm [thread:$0]  %s477, 128, %s10, [#allocation15]
    $region69: #{tpu_custom_call.1} parent=1 // pred_fallthru
      _
    // Predicated region
    $region70: #{tpu_custom_call.1} parent=1 // pred_check
      _
    $region71: #{tpu_custom_call.1} parent=1 // pred_check_branch
      %481 = sbr.rel (0) target = $region73
    $region72: #{tpu_custom_call.1} parent=1 // pred_region
      %s483 = ssub.s32 128, 128
      %484 = vsyncadd [#allocation15], %s483
      %s486 = sshll.u32 [#allocation16], 4
      %s487 = int_to_ptr.vmem [resolvable:$true] %s486
      %489 = dma.vmem_to_hbm [thread:$0]  %s487, 128, %s11, [#allocation15]
    $region73: #{tpu_custom_call.1} parent=1 // pred_fallthru
      _
    // Predicated region
    $region74: #{tpu_custom_call.1} parent=1 // pred_check
      _
    $region75: #{tpu_custom_call.1} parent=1 // pred_check_branch
      %491 = sbr.rel (0) target = $region77
    $region76: #{tpu_custom_call.1} parent=1 // pred_region
      %492 = dma.done [#allocation4], 128
    $region77: #{tpu_custom_call.1} parent=1 // pred_fallthru
      _
    // Predicated region
    $region78: #{tpu_custom_call.1} parent=1 // pred_check
      _
    $region79: #{tpu_custom_call.1} parent=1 // pred_check_branch
      %494 = sbr.rel (0) target = $region81
    $region80: #{tpu_custom_call.1} parent=1 // pred_region
      %495 = dma.done [#allocation15], 128
    $region81: #{tpu_custom_call.1} parent=1 // pred_fallthru
      _
    // Predicated region
    $region82: #{tpu_custom_call.1} parent=1 // pred_check
      _
    $region83: #{tpu_custom_call.1} parent=1 // pred_check_branch
      %497 = sbr.rel (0) target = $region85
    $region84: #{tpu_custom_call.1} parent=1 // pred_region
      %498 = dma.done [#allocation15], 128
    $region85: #{tpu_custom_call.1} parent=1 // pred_fallthru
      _
    %499 = vsyncpa [#allocation3], 1
    %500 = vsyncpa [#allocation6], 1
    %501 = vsyncpa [#allocation9], 1
    %502 = vsyncpa [#allocation12], 1
    %503 = vsyncpa [#allocation4], 1
    %504 = vsyncpa [#allocation15], 1

</llo_original>
